<compile_context>
chip_gen: v7x
topology: tpu7x:2x2x1
jax: 0.10.0
libtpu: 0.0.40
codegen_flags: <defaults>
</compile_context>

<pallas_src>
import math
from functools import partial

import jax
import jax.numpy as jnp
from jax import lax
from jax.experimental import pallas as pl
from jax.experimental.pallas import tpu as pltpu


def _attention_block_kernel(x_ref, gamma_ref, beta_ref, wqkv_ref, bqkv_ref,
                            wproj_ref, bproj_ref, out_ref, qkv_scr, a_scr,
                            *, groups, n_heads, eps, t_real):
    x = x_ref[...]                                   # (C, Tp) float32
    C, Tp = x.shape
    hd = C // n_heads
    cpg = C // groups
    padded = Tp != t_real

    # ---- GroupNorm(groups, C), biased variance, PyTorch semantics ----------
    # Per-channel lane reductions on the native (C, Tp) layout, then a tiny
    # in-group reduce on (C, 1) data (avoids relayouting the big block).
    cnt = float(cpg * t_real)
    csum = jnp.sum(x, axis=1, keepdims=True)                         # (C, 1)
    gsum = jnp.sum(csum.reshape(groups, cpg), axis=1, keepdims=True)  # (G, 1)
    mean_c = jnp.broadcast_to(gsum / cnt, (groups, cpg)).reshape(C, 1)
    diff = x - mean_c
    if padded:
        col_ok = lax.broadcasted_iota(jnp.int32, (1, Tp), 1) < t_real
        diff = jnp.where(col_ok, diff, 0.0)          # exclude pad from stats
    d2 = jnp.sum(diff * diff, axis=1, keepdims=True)                 # (C, 1)
    gvar = jnp.sum(d2.reshape(groups, cpg), axis=1, keepdims=True) / cnt
    rstd_c = jnp.broadcast_to(lax.rsqrt(gvar + eps), (groups, cpg)).reshape(C, 1)
    xn = diff * rstd_c * gamma_ref[...] + beta_ref[...]              # (C, Tp)

    # ---- 1x1 conv C -> 3C (bf16 MXU operands, f32 accumulation) ------------
    # NOTE: 1/sqrt(sqrt(hd)) is already folded into the q/k rows of w_qkv/b_qkv.
    qkv = jnp.dot(wqkv_ref[...], xn.astype(jnp.bfloat16),
                  preferred_element_type=jnp.float32) + bqkv_ref[...]
    qkv_scr[...] = qkv.astype(jnp.bfloat16)                          # (3C, Tp)

    if padded:
        key_ok = lax.broadcasted_iota(jnp.int32, (Tp, 1), 0) < t_real

    # ---- multi-head attention, one head at a time (bounded VMEM) -----------
    def head_body(h, carry):
        q_off = pl.multiple_of(h * hd, hd)
        k_off = pl.multiple_of(C + h * hd, hd)
        v_off = pl.multiple_of(2 * C + h * hd, hd)
        q = qkv_scr[pl.ds(q_off, hd), :]             # (hd, Tp) bf16, t on lanes
        k = qkv_scr[pl.ds(k_off, hd), :]             # (hd, Tp) bf16, s on lanes
        v = qkv_scr[pl.ds(v_off, hd), :]             # (hd, Tp) bf16, s on lanes
        # scores laid out (key s = sublane, query t = lane): softmax reductions
        # and the 1/l broadcast are layout-natural, no XLU transposes.
        s = lax.dot_general(k, q, (((0,), (0,)), ((), ())),
                            preferred_element_type=jnp.float32)      # (Tp, Tp)
        if padded:
            s = jnp.where(key_ok, s, -jnp.inf)       # mask padded keys
        m = jnp.max(s, axis=0, keepdims=True)                        # (1, Tp)
        p = jnp.exp(s - m)                                           # f32
        l = jnp.sum(p, axis=0, keepdims=True)                        # (1, Tp)
        # deferred normalization: PV first, then scale (hd,Tp) by 1/l (EUP).
        a_h = lax.dot_general(v, p.astype(jnp.bfloat16),
                              (((1,), (0,)), ((), ())),
                              preferred_element_type=jnp.float32)    # (hd, Tp)
        a_scr[pl.ds(q_off, hd), :] = a_h * pl.reciprocal(l, approx=True)
        return carry

    lax.fori_loop(0, n_heads, head_body, 0)

    # ---- 1x1 proj_out + residual --------------------------------------------
    h_out = jnp.dot(wproj_ref[...], a_scr[...].astype(jnp.bfloat16),
                    preferred_element_type=jnp.float32) + bproj_ref[...]
    out_ref[...] = x + h_out


def attention_block(x, params, *, num_heads, groups=32, eps=1e-5):
    """x: [B, C, H, W] float32 (NCHW like PyTorch). Returns [B, C, H, W]."""
    B, C, H, W = x.shape
    T = H * W
    Tp = ((T + 127) // 128) * 128          # lane-dense padding of the seq axis
    x_flat = x.reshape(B, C, T)
    if Tp != T:
        x_flat = jnp.pad(x_flat, ((0, 0), (0, 0), (0, Tp - T)))

    hd = C // num_heads
    scale = 1.0 / math.sqrt(math.sqrt(hd))
    # Fold the q/k scale into the constant weights (exact, done once, f32).
    qk_scale = jnp.concatenate([jnp.full((2 * C, 1), scale, jnp.float32),
                                jnp.ones((C, 1), jnp.float32)], axis=0)
    wqkv = params['w_qkv'].reshape(3 * C, C).astype(jnp.float32) * qk_scale
    bqkv = params['b_qkv'].reshape(3 * C, 1).astype(jnp.float32) * qk_scale
    wqkv = wqkv.astype(jnp.bfloat16)
    wproj = params['w_proj'].reshape(C, C).astype(jnp.bfloat16)
    bproj = params['b_proj'].reshape(C, 1).astype(jnp.float32)
    gamma = params['gamma'].reshape(C, 1).astype(jnp.float32)
    beta = params['beta'].reshape(C, 1).astype(jnp.float32)

    kernel = partial(_attention_block_kernel, groups=groups, n_heads=num_heads,
                     eps=eps, t_real=T)

    def const2d(shape):
        return pl.BlockSpec(shape, lambda b: (0, 0))

    # Rough per-step VMEM footprint -> raise the scoped limit with headroom
    # (default 16/32 MiB limits are far below physical VMEM).
    est = (4 * C * Tp * 4                    # x / out blocks, double-buffered
           + 3 * C * Tp * 2 + C * Tp * 4     # qkv (bf16) + a (f32) scratch
           + 3 * Tp * Tp * 4                 # per-head score / exp tiles
           + 2 * (3 * C * C + C * C) * 2     # bf16 weights, double-buffered
           + 2 * 6 * C * 4)                  # gamma/beta/biases
    vmem_limit = int(min(max(2 * est, 16 * 2 ** 20), 96 * 2 ** 20))

    out = pl.pallas_call(
        kernel,
        out_shape=jax.ShapeDtypeStruct((B, C, Tp), jnp.float32),
        grid_spec=pltpu.PrefetchScalarGridSpec(
            num_scalar_prefetch=0,
            grid=(B,),
            in_specs=[
                pl.BlockSpec((None, C, Tp), lambda b: (b, 0, 0)),  # x[b]
                const2d((C, 1)),        # gamma
                const2d((C, 1)),        # beta
                const2d((3 * C, C)),    # w_qkv (bf16, q/k rows pre-scaled)
                const2d((3 * C, 1)),    # b_qkv (pre-scaled)
                const2d((C, C)),        # w_proj (bf16)
                const2d((C, 1)),        # b_proj
            ],
            out_specs=pl.BlockSpec((None, C, Tp), lambda b: (b, 0, 0)),
            scratch_shapes=[pltpu.VMEM((3 * C, Tp), jnp.bfloat16),  # qkv
                            pltpu.VMEM((C, Tp), jnp.float32)],      # attn out
        ),
        compiler_params=pltpu.CompilerParams(
            dimension_semantics=("parallel",),
            vmem_limit_bytes=vmem_limit),
    )(x_flat, gamma, beta, wqkv, bqkv, wproj, bproj)
    out = out[..., :T]
    return out.reshape(B, C, H, W)


def reference(x, params, *, num_heads, groups=32, eps=1e-5):
    """Pure-JAX f32 replica of AttentionBlock._forward for a sanity check."""
    B, C, H, W = x.shape
    T = H * W
    xf = x.reshape(B, C, T)
    xg = xf.reshape(B, groups, (C // groups) * T)
    mean = xg.mean(-1, keepdims=True)
    var = ((xg - mean) ** 2).mean(-1, keepdims=True)
    xn = ((xg - mean) / jnp.sqrt(var + eps)).reshape(B, C, T)
    xn = xn * params['gamma'][None, :, None] + params['beta'][None, :, None]
    qkv = jnp.einsum('oc,bct->bot', params['w_qkv'], xn) \
        + params['b_qkv'][None, :, None]
    hd = C // num_heads
    q, k, v = jnp.split(qkv, 3, axis=1)
    q = q.reshape(B * num_heads, hd, T)
    k = k.reshape(B * num_heads, hd, T)
    v = v.reshape(B * num_heads, hd, T)
    scale = 1.0 / math.sqrt(math.sqrt(hd))
    w = jnp.einsum('gct,gcs->gts', q * scale, k * scale)
    w = jax.nn.softmax(w, axis=-1)
    a = jnp.einsum('gts,gcs->gct', w, v).reshape(B, C, T)
    h = jnp.einsum('oc,bct->bot', params['w_proj'], a) \
        + params['b_proj'][None, :, None]
    return (xf + h).reshape(B, C, H, W)


if __name__ == "__main__":
    # channels=32 so normalization(channels)=GroupNorm(32, 32) divides evenly;
    # num_heads=2 -> head_dim=16 (valid for QKVFlashAttention).
    # T = 8*8 = 64 exercises the lane-padding / key-masking path.
    B, C, Hs, Ws = 2, 32, 8, 8
    num_heads = 2

    key = jax.random.PRNGKey(0)
    kx, kg, kb, kw, kwb, kp, kpb = jax.random.split(key, 7)
    x = jax.random.normal(kx, (B, C, Hs, Ws), dtype=jnp.float32)
    # NOTE: in the PyTorch module proj_out is zero_module()-initialized; we use
    # small non-zero proj weights here so the test actually exercises the
    # attention path (zero weights would make the residual branch trivially 0).
    params = {
        'gamma': 1.0 + 0.1 * jax.random.normal(kg, (C,), jnp.float32),
        'beta': 0.1 * jax.random.normal(kb, (C,), jnp.float32),
        'w_qkv': 0.1 * jax.random.normal(kw, (3 * C, C), jnp.float32),
        'b_qkv': 0.01 * jax.random.normal(kwb, (3 * C,), jnp.float32),
        'w_proj': 0.1 * jax.random.normal(kp, (C, C), jnp.float32),
        'b_proj': 0.01 * jax.random.normal(kpb, (C,), jnp.float32),
    }

    out = attention_block(x, params, num_heads=num_heads)
    out = jax.block_until_ready(out)
    ref = reference(x, params, num_heads=num_heads)

    assert out.shape == x.shape
    assert bool(jnp.all(jnp.isfinite(out)))
    # bf16 MXU operands + approx reciprocal -> slightly looser tolerance.
    assert bool(jnp.allclose(out, ref, atol=3e-2, rtol=3e-2)), \
        float(jnp.max(jnp.abs(out - ref)))
    print("KERNEL_OK")
</pallas_src>

<mosaic_0001>
module attributes {stable_mosaic.version = 11 : i64} {
  func.func @_attention_block_kernel(%arg0: i32, %arg1: memref<1x32x128xf32, #tpu.memory_space<vmem>>, %arg2: memref<32x1xf32, #tpu.memory_space<vmem>>, %arg3: memref<32x1xf32, #tpu.memory_space<vmem>>, %arg4: memref<96x32xbf16, #tpu.memory_space<vmem>>, %arg5: memref<96x1xf32, #tpu.memory_space<vmem>>, %arg6: memref<32x32xbf16, #tpu.memory_space<vmem>>, %arg7: memref<32x1xf32, #tpu.memory_space<vmem>>, %arg8: memref<1x32x128xf32, #tpu.memory_space<vmem>>, %arg9: memref<96x128xbf16, #tpu.memory_space<vmem>>, %arg10: memref<32x128xf32, #tpu.memory_space<vmem>>) attributes {dimension_semantics = [#tpu.dimension_semantics<parallel>], iteration_bounds = array<i64: 2>, scalar_prefetch = 0 : i64, scratch_operands = 2 : i64, tpu.core_type = #tpu.core_type<tc>, window_params = [{transform_indices = @transform_0, window_bounds = array<i64: 1, 32, 128>}, {pipeline_mode = #tpu.pipeline_mode<synchronous>, transform_indices = @transform_1, window_bounds = array<i64: 32, 1>}, {pipeline_mode = #tpu.pipeline_mode<synchronous>, transform_indices = @transform_2, window_bounds = array<i64: 32, 1>}, {pipeline_mode = #tpu.pipeline_mode<synchronous>, transform_indices = @transform_3, window_bounds = array<i64: 96, 32>}, {pipeline_mode = #tpu.pipeline_mode<synchronous>, transform_indices = @transform_4, window_bounds = array<i64: 96, 1>}, {pipeline_mode = #tpu.pipeline_mode<synchronous>, transform_indices = @transform_5, window_bounds = array<i64: 32, 32>}, {pipeline_mode = #tpu.pipeline_mode<synchronous>, transform_indices = @transform_6, window_bounds = array<i64: 32, 1>}, {transform_indices = @transform_7, window_bounds = array<i64: 1, 32, 128>}]} {
    %c0 = arith.constant 0 : index
    %c0_0 = arith.constant 0 : index
    %c0_1 = arith.constant 0 : index
    %0 = vector.load %arg1[%c0, %c0_0, %c0_1] : memref<1x32x128xf32, #tpu.memory_space<vmem>>, vector<1x32x128xf32>
    %1 = vector.shape_cast %0 : vector<1x32x128xf32> to vector<32x128xf32>
    %cst = arith.constant dense<0.000000e+00> : vector<32xf32>
    %2 = vector.multi_reduction <add>, %1, %cst [1] : vector<32x128xf32> to vector<32xf32>
    %3 = vector.shape_cast %2 : vector<32xf32> to vector<32x1xf32>
    %cst_2 = arith.constant dense<0.000000e+00> : vector<32xf32>
    %4 = vector.multi_reduction <add>, %3, %cst_2 [1] : vector<32x1xf32> to vector<32xf32>
    %5 = vector.shape_cast %4 : vector<32xf32> to vector<32x1xf32>
    %cst_3 = arith.constant 6.400000e+01 : f32
    %6 = vector.broadcast %cst_3 : f32 to vector<32x1xf32>
    %7 = arith.divf %5, %6 : vector<32x1xf32>
    %8 = vector.broadcast %7 : vector<32x1xf32> to vector<32x128xf32>
    %9 = arith.subf %1, %8 : vector<32x128xf32>
    %10 = tpu.iota {dimensions = array<i32: 1>} : vector<1x128xi32>
    %c64_i32 = arith.constant 64 : i32
    %11 = vector.broadcast %c64_i32 : i32 to vector<1x128xi32>
    %12 = arith.cmpi slt, %10, %11 : vector<1x128xi32>
    %cst_4 = arith.constant 0.000000e+00 : f32
    %13 = vector.shape_cast %12 : vector<1x128xi1> to vector<1x128xi1>
    %14 = vector.broadcast %13 : vector<1x128xi1> to vector<32x128xi1>
    %15 = vector.broadcast %cst_4 : f32 to vector<32x128xf32>
    %16 = arith.select %14, %9, %15 : vector<32x128xi1>, vector<32x128xf32>
    %17 = arith.mulf %16, %16 : vector<32x128xf32>
    %cst_5 = arith.constant dense<0.000000e+00> : vector<32xf32>
    %18 = vector.multi_reduction <add>, %17, %cst_5 [1] : vector<32x128xf32> to vector<32xf32>
    %19 = vector.shape_cast %18 : vector<32xf32> to vector<32x1xf32>
    %cst_6 = arith.constant dense<0.000000e+00> : vector<32xf32>
    %20 = vector.multi_reduction <add>, %19, %cst_6 [1] : vector<32x1xf32> to vector<32xf32>
    %21 = vector.shape_cast %20 : vector<32xf32> to vector<32x1xf32>
    %cst_7 = arith.constant 6.400000e+01 : f32
    %22 = vector.broadcast %cst_7 : f32 to vector<32x1xf32>
    %23 = arith.divf %21, %22 : vector<32x1xf32>
    %cst_8 = arith.constant 9.99999974E-6 : f32
    %24 = vector.broadcast %cst_8 : f32 to vector<32x1xf32>
    %25 = arith.addf %23, %24 : vector<32x1xf32>
    %26 = math.rsqrt %25 : vector<32x1xf32>
    %27 = vector.broadcast %26 : vector<32x1xf32> to vector<32x128xf32>
    %28 = arith.mulf %16, %27 : vector<32x128xf32>
    %c0_9 = arith.constant 0 : index
    %c0_10 = arith.constant 0 : index
    %29 = vector.load %arg2[%c0_9, %c0_10] : memref<32x1xf32, #tpu.memory_space<vmem>>, vector<32x1xf32>
    %30 = vector.broadcast %29 : vector<32x1xf32> to vector<32x128xf32>
    %31 = arith.mulf %28, %30 : vector<32x128xf32>
    %c0_11 = arith.constant 0 : index
    %c0_12 = arith.constant 0 : index
    %32 = vector.load %arg3[%c0_11, %c0_12] : memref<32x1xf32, #tpu.memory_space<vmem>>, vector<32x1xf32>
    %33 = vector.broadcast %32 : vector<32x1xf32> to vector<32x128xf32>
    %34 = arith.addf %31, %33 : vector<32x128xf32>
    %c0_13 = arith.constant 0 : index
    %c0_14 = arith.constant 0 : index
    %35 = vector.load %arg4[%c0_13, %c0_14] : memref<96x32xbf16, #tpu.memory_space<vmem>>, vector<96x32xbf16>
    %36 = arith.truncf %34 : vector<32x128xf32> to vector<32x128xbf16>
    %cst_15 = arith.constant dense<0.000000e+00> : vector<96x128xf32>
    %37 = tpu.matmul %35, %36, %cst_15 {dimension_numbers = #tpu.dot_dimension_numbers<[1], [0], [0], [1], [0, 0, 1, 1], [], []>} : vector<96x32xbf16>, vector<32x128xbf16>, vector<96x128xf32> -> vector<96x128xf32>
    %c0_16 = arith.constant 0 : index
    %c0_17 = arith.constant 0 : index
    %38 = vector.load %arg5[%c0_16, %c0_17] : memref<96x1xf32, #tpu.memory_space<vmem>>, vector<96x1xf32>
    %39 = vector.broadcast %38 : vector<96x1xf32> to vector<96x128xf32>
    %40 = arith.addf %37, %39 : vector<96x128xf32>
    %41 = arith.truncf %40 : vector<96x128xf32> to vector<96x128xbf16>
    %c0_18 = arith.constant 0 : index
    %c0_19 = arith.constant 0 : index
    %42 = vector.load %arg9[%c0_18, %c0_19] : memref<96x128xbf16, #tpu.memory_space<vmem>>, vector<96x128xbf16>
    tpu.vector_store %arg9[%c0_18, %c0_19], %41 {strides = array<i32>} : memref<96x128xbf16, #tpu.memory_space<vmem>>, vector<96x128xbf16>,
    %43 = tpu.iota {dimensions = array<i32: 0>} : vector<128x1xi32>
    %c64_i32_20 = arith.constant 64 : i32
    %44 = vector.broadcast %c64_i32_20 : i32 to vector<128x1xi32>
    %45 = arith.cmpi slt, %43, %44 : vector<128x1xi32>
    %c0_i32 = arith.constant 0 : i32
    %c2_i32 = arith.constant 2 : i32
    %46 = arith.addi %c0_i32, %c2_i32 : i32
    %c1_i32 = arith.constant 1 : i32
    scf.for %arg11 = %c0_i32 to %46 step %c1_i32  : i32 {
      %c16_i32 = arith.constant 16 : i32
      %58 = arith.muli %arg11, %c16_i32 : i32
      %59 = tpu.assume_multiple %58, 16 : i32
      %c16_i32_32 = arith.constant 16 : i32
      %60 = arith.muli %arg11, %c16_i32_32 : i32
      %c32_i32 = arith.constant 32 : i32
      %61 = arith.addi %c32_i32, %60 : i32
      %62 = tpu.assume_multiple %61, 16 : i32
      %c16_i32_33 = arith.constant 16 : i32
      %63 = arith.muli %arg11, %c16_i32_33 : i32
      %c64_i32_34 = arith.constant 64 : i32
      %64 = arith.addi %c64_i32_34, %63 : i32
      %65 = tpu.assume_multiple %64, 16 : i32
      %66 = arith.index_cast %59 : i32 to index
      %c0_35 = arith.constant 0 : index
      %67 = vector.load %arg9[%66, %c0_35] : memref<96x128xbf16, #tpu.memory_space<vmem>>, vector<16x128xbf16>
      %68 = arith.index_cast %62 : i32 to index
      %c0_36 = arith.constant 0 : index
      %69 = vector.load %arg9[%68, %c0_36] : memref<96x128xbf16, #tpu.memory_space<vmem>>, vector<16x128xbf16>
      %70 = arith.index_cast %65 : i32 to index
      %c0_37 = arith.constant 0 : index
      %71 = vector.load %arg9[%70, %c0_37] : memref<96x128xbf16, #tpu.memory_space<vmem>>, vector<16x128xbf16>
      %cst_38 = arith.constant dense<0.000000e+00> : vector<128x128xf32>
      %72 = tpu.matmul %69, %67, %cst_38 {dimension_numbers = #tpu.dot_dimension_numbers<[0], [0], [1], [1], [0, 1, 1, 1], [], []>} : vector<16x128xbf16>, vector<16x128xbf16>, vector<128x128xf32> -> vector<128x128xf32>
      %cst_39 = arith.constant 0xFF800000 : f32
      %73 = vector.shape_cast %45 : vector<128x1xi1> to vector<128x1xi1>
      %74 = vector.broadcast %73 : vector<128x1xi1> to vector<128x128xi1>
      %75 = vector.broadcast %cst_39 : f32 to vector<128x128xf32>
      %76 = arith.select %74, %72, %75 : vector<128x128xi1>, vector<128x128xf32>
      %cst_40 = arith.constant dense<0xFF800000> : vector<128xf32>
      %77 = vector.multi_reduction <maximumf>, %76, %cst_40 [0] : vector<128x128xf32> to vector<128xf32>
      %78 = vector.shape_cast %77 : vector<128xf32> to vector<1x128xf32>
      %79 = vector.broadcast %78 : vector<1x128xf32> to vector<128x128xf32>
      %80 = arith.subf %76, %79 : vector<128x128xf32>
      %81 = math.exp %80 : vector<128x128xf32>
      %cst_41 = arith.constant dense<0.000000e+00> : vector<128xf32>
      %82 = vector.multi_reduction <add>, %81, %cst_41 [0] : vector<128x128xf32> to vector<128xf32>
      %83 = vector.shape_cast %82 : vector<128xf32> to vector<1x128xf32>
      %84 = arith.truncf %81 : vector<128x128xf32> to vector<128x128xbf16>
      %cst_42 = arith.constant dense<0.000000e+00> : vector<16x128xf32>
      %85 = tpu.matmul %71, %84, %cst_42 {dimension_numbers = #tpu.dot_dimension_numbers<[1], [0], [0], [1], [0, 0, 1, 1], [], []>} : vector<16x128xbf16>, vector<128x128xbf16>, vector<16x128xf32> -> vector<16x128xf32>
      %86 = tpu.reciprocal %83 {approx = true} : vector<1x128xf32> -> vector<1x128xf32>
      %87 = vector.broadcast %86 : vector<1x128xf32> to vector<16x128xf32>
      %88 = arith.mulf %85, %87 : vector<16x128xf32>
      %89 = arith.index_cast %59 : i32 to index
      %c0_43 = arith.constant 0 : index
      %90 = vector.load %arg10[%89, %c0_43] : memref<32x128xf32, #tpu.memory_space<vmem>>, vector<16x128xf32>
      tpu.vector_store %arg10[%89, %c0_43], %88 {strides = array<i32>} : memref<32x128xf32, #tpu.memory_space<vmem>>, vector<16x128xf32>,
    }
    %c2_i32_21 = arith.constant 2 : i32
    %c0_22 = arith.constant 0 : index
    %c0_23 = arith.constant 0 : index
    %47 = vector.load %arg6[%c0_22, %c0_23] : memref<32x32xbf16, #tpu.memory_space<vmem>>, vector<32x32xbf16>
    %c0_24 = arith.constant 0 : index
    %c0_25 = arith.constant 0 : index
    %48 = vector.load %arg10[%c0_24, %c0_25] : memref<32x128xf32, #tpu.memory_space<vmem>>, vector<32x128xf32>
    %49 = arith.truncf %48 : vector<32x128xf32> to vector<32x128xbf16>
    %cst_26 = arith.constant dense<0.000000e+00> : vector<32x128xf32>
    %50 = tpu.matmul %47, %49, %cst_26 {dimension_numbers = #tpu.dot_dimension_numbers<[1], [0], [0], [1], [0, 0, 1, 1], [], []>} : vector<32x32xbf16>, vector<32x128xbf16>, vector<32x128xf32> -> vector<32x128xf32>
    %c0_27 = arith.constant 0 : index
    %c0_28 = arith.constant 0 : index
    %51 = vector.load %arg7[%c0_27, %c0_28] : memref<32x1xf32, #tpu.memory_space<vmem>>, vector<32x1xf32>
    %52 = vector.broadcast %51 : vector<32x1xf32> to vector<32x128xf32>
    %53 = arith.addf %50, %52 : vector<32x128xf32>
    %54 = arith.addf %1, %53 : vector<32x128xf32>
    %c0_29 = arith.constant 0 : index
    %c0_30 = arith.constant 0 : index
    %c0_31 = arith.constant 0 : index
    %55 = vector.load %arg8[%c0_29, %c0_30, %c0_31] : memref<1x32x128xf32, #tpu.memory_space<vmem>>, vector<1x32x128xf32>
    %56 = vector.shape_cast %55 : vector<1x32x128xf32> to vector<32x128xf32>
    %57 = vector.shape_cast %54 : vector<32x128xf32> to vector<1x32x128xf32>
    tpu.vector_store %arg8[%c0_29, %c0_30, %c0_31], %57 {strides = array<i32>} : memref<1x32x128xf32, #tpu.memory_space<vmem>>, vector<1x32x128xf32>,
    return
  }
  func.func @transform_0(%arg0: i32) -> (i32, i32, i32) {
    %c0_i32 = arith.constant 0 : i32
    %c0_i32_0 = arith.constant 0 : i32
    %c0_i32_1 = arith.constant 0 : i32
    return %arg0, %c0_i32, %c0_i32_0 : i32, i32, i32
  }
  func.func @transform_1(%arg0: i32) -> (i32, i32) {
    %c0_i32 = arith.constant 0 : i32
    %c0_i32_0 = arith.constant 0 : i32
    %c0_i32_1 = arith.constant 0 : i32
    return %c0_i32, %c0_i32_0 : i32, i32
  }
  func.func @transform_2(%arg0: i32) -> (i32, i32) {
    %c0_i32 = arith.constant 0 : i32
    %c0_i32_0 = arith.constant 0 : i32
    %c0_i32_1 = arith.constant 0 : i32
    return %c0_i32, %c0_i32_0 : i32, i32
  }
  func.func @transform_3(%arg0: i32) -> (i32, i32) {
    %c0_i32 = arith.constant 0 : i32
    %c0_i32_0 = arith.constant 0 : i32
    %c0_i32_1 = arith.constant 0 : i32
    return %c0_i32, %c0_i32_0 : i32, i32
  }
  func.func @transform_4(%arg0: i32) -> (i32, i32) {
    %c0_i32 = arith.constant 0 : i32
    %c0_i32_0 = arith.constant 0 : i32
    %c0_i32_1 = arith.constant 0 : i32
    return %c0_i32, %c0_i32_0 : i32, i32
  }
  func.func @transform_5(%arg0: i32) -> (i32, i32) {
    %c0_i32 = arith.constant 0 : i32
    %c0_i32_0 = arith.constant 0 : i32
    %c0_i32_1 = arith.constant 0 : i32
    return %c0_i32, %c0_i32_0 : i32, i32
  }
  func.func @transform_6(%arg0: i32) -> (i32, i32) {
    %c0_i32 = arith.constant 0 : i32
    %c0_i32_0 = arith.constant 0 : i32
    %c0_i32_1 = arith.constant 0 : i32
    return %c0_i32, %c0_i32_0 : i32, i32
  }
  func.func @transform_7(%arg0: i32) -> (i32, i32, i32) {
    %c0_i32 = arith.constant 0 : i32
    %c0_i32_0 = arith.constant 0 : i32
    %c0_i32_1 = arith.constant 0 : i32
    return %arg0, %c0_i32, %c0_i32_0 : i32, i32, i32
  }
}

</mosaic_0001>

<llo_original>
// kernel: tpu_custom_call.1
$region0: #{tpu_custom_call.1}
  #allocation0 [shape = 'u32[]', space=smem, size = 0x4, offset = 0x4, fixed_abs, tag = 'smem constant byte address 0x4 - core index']
  #allocation1 [shape = 'u32[144,128]{1,0:T(1,128)}', space=vmem, size = 0x12000, scoped, tag = 'internal scratch']
  #allocation2 [shape = 'bf16[96,128]{1,0:T(16,128)(2,1)}', space=vmem, size = 0x6000, scoped, tag = 'scratch operand']
  #allocation3 [shape = 'f32[32,128]{1,0:T(8,128)}', space=vmem, size = 0x4000, scoped, tag = 'scratch operand']
  %s0 = inlined_call_operand.vmem [shape: f32[2,32,128], index: 0, kind: input, shape index: {}]
  %s1 = inlined_call_operand.vmem [shape: f32[32,1], index: 1, kind: input, shape index: {}]
  %s2 = inlined_call_operand.vmem [shape: f32[32,1], index: 2, kind: input, shape index: {}]
  %s3 = inlined_call_operand.vmem [shape: bf16[96,32], index: 3, kind: input, shape index: {}]
  %s4 = inlined_call_operand.vmem [shape: f32[96,1], index: 4, kind: input, shape index: {}]
  %s5 = inlined_call_operand.vmem [shape: bf16[32,32], index: 5, kind: input, shape index: {}]
  %s6 = inlined_call_operand.vmem [shape: f32[32,1], index: 6, kind: input, shape index: {}]
  %s7 = inlined_call_operand.hbm [shape: f32[2,32,128], index: 7, kind: output, shape index: {}]
  %s8 = sld [smem:[#allocation0]]
  $region68: #{tpu_custom_call.1} parent=0
    _
  %s10 = ssub.s32 1, %s8
  %s11 = scalar_select 0, %s10, %s8
  $region1: #{tpu_custom_call.1} parent=0
    #allocation4 [shape = 'u8[32768]{0}', space=vmem, size = 0x8000, scoped, tag = 'output window, operand 0']
    #allocation5 [shape = 's32[2]{0}', space=sflag, size = 0x8, scoped, tag = 'scoped memory for tpu_custom_call.1']
    %12 = vsyncpa [#allocation5], 0
    %s13 = scalar_lea.sflag [#allocation5], 1
    %14 = vsyncpa %s13, 0
    loop: start=0, step=1, limit=4
    $region2: #{tpu_custom_call.1} parent=1 // loop_pre_header
      _
    $region3: #{tpu_custom_call.1} parent=1 // loop_header
      %s16 = sphi 0, %s20
      %p17 = scmp.ge.s32.totalorder %s16, 4
      %s26 = sphi 0, %s28
      %s29 = sphi 0, %s26
      %s30 = sphi 0, %s29
      %s46 = sphi 0, %s30
      %s50 = sphi 0, %s50
      %s52 = sphi 0, %s50
      %s53 = sphi 0, %s52
      %s67 = sphi 0, %s53
      %s71 = sphi 0, %s71
      %s73 = sphi 0, %s71
      %s74 = sphi 0, %s73
      %s88 = sphi 0, %s74
      %s92 = sphi 0, %s92
      %s94 = sphi 0, %s92
      %s95 = sphi 0, %s94
      %s109 = sphi 0, %s95
      %s113 = sphi 0, %s113
      %s115 = sphi 0, %s113
      %s116 = sphi 0, %s115
      %s130 = sphi 0, %s116
      %s134 = sphi 0, %s134
      %s136 = sphi 0, %s134
      %s137 = sphi 0, %s136
      %s151 = sphi 0, %s137
      %s155 = sphi 0, %s155
      %s157 = sphi 0, %s155
      %s158 = sphi 0, %s157
      %s172 = sphi 0, %s158
      %s178 = sphi 0, %s180
      %s181 = sphi 0, %s178
      %s182 = sphi 0, %s181
      %s198 = sphi 0, %s182
    $region4: #{tpu_custom_call.1} parent=1 // loop_header_branch
      %19 = sbr.rel (%p17) target = $region8
    $region5: #{tpu_custom_call.1} parent=1 // loop_body
      %s21 = ssub.s32 %s16, 1
      %s22 = ssub.s32 %s16, 2
      %s23 = sadd.s32 %s16, 1
      %s24 = ssub.s32 %s16, %s23
      %p25 = scmp.eq.s32.totalorder %s24, 0
      %s27 = sadd.s32 %s26, 1
      %s28 = scalar_select %p25, %s26, %s27
      %p31 = pneg %p25
      %p32 = scmp.eq.s32.totalorder %s16, 1
      %p33 = por %p31, %p32
      %p34 = scmp.ne.s32.totalorder %s26, %s29
      %p35 = scmp.eq.s32.totalorder %s16, 0
      %p36 = por %p34, %p35
      %p37 = scmp.ne.s32.totalorder %s26, %s29
      %p38 = scmp.eq.s32.totalorder %s21, 1
      %p39 = por %p37, %p38
      %p40 = scmp.ne.s32.totalorder %s29, %s30
      %p41 = scmp.eq.s32.totalorder %s21, 0
      %p42 = por %p40, %p41
      %p43 = scmp.ne.s32.totalorder %s29, %s30
      %p44 = scmp.eq.s32.totalorder %s22, 1
      %p45 = por %p43, %p44
      %p47 = scmp.ne.s32.totalorder %s30, %s46
      %p48 = scmp.eq.s32.totalorder %s22, 0
      %p49 = por %p47, %p48
      %s51 = sadd.s32 %s50, 1
      %p54 = scmp.eq.s32.totalorder %s16, 1
      %p55 = scmp.ne.s32.totalorder %s50, %s52
      %p56 = scmp.eq.s32.totalorder %s16, 0
      %p57 = por %p55, %p56
      %p58 = scmp.ne.s32.totalorder %s50, %s52
      %p59 = scmp.eq.s32.totalorder %s21, 1
      %p60 = por %p58, %p59
      %p61 = scmp.ne.s32.totalorder %s52, %s53
      %p62 = scmp.eq.s32.totalorder %s21, 0
      %p63 = por %p61, %p62
      %p64 = scmp.ne.s32.totalorder %s52, %s53
      %p65 = scmp.eq.s32.totalorder %s22, 1
      %p66 = por %p64, %p65
      %p68 = scmp.ne.s32.totalorder %s53, %s67
      %p69 = scmp.eq.s32.totalorder %s22, 0
      %p70 = por %p68, %p69
      %s72 = sadd.s32 %s71, 1
      %p75 = scmp.eq.s32.totalorder %s16, 1
      %p76 = scmp.ne.s32.totalorder %s71, %s73
      %p77 = scmp.eq.s32.totalorder %s16, 0
      %p78 = por %p76, %p77
      %p79 = scmp.ne.s32.totalorder %s71, %s73
      %p80 = scmp.eq.s32.totalorder %s21, 1
      %p81 = por %p79, %p80
      %p82 = scmp.ne.s32.totalorder %s73, %s74
      %p83 = scmp.eq.s32.totalorder %s21, 0
      %p84 = por %p82, %p83
      %p85 = scmp.ne.s32.totalorder %s73, %s74
      %p86 = scmp.eq.s32.totalorder %s22, 1
      %p87 = por %p85, %p86
      %p89 = scmp.ne.s32.totalorder %s74, %s88
      %p90 = scmp.eq.s32.totalorder %s22, 0
      %p91 = por %p89, %p90
      %s93 = sadd.s32 %s92, 1
      %p96 = scmp.eq.s32.totalorder %s16, 1
      %p97 = scmp.ne.s32.totalorder %s92, %s94
      %p98 = scmp.eq.s32.totalorder %s16, 0
      %p99 = por %p97, %p98
      %p100 = scmp.ne.s32.totalorder %s92, %s94
      %p101 = scmp.eq.s32.totalorder %s21, 1
      %p102 = por %p100, %p101
      %p103 = scmp.ne.s32.totalorder %s94, %s95
      %p104 = scmp.eq.s32.totalorder %s21, 0
      %p105 = por %p103, %p104
      %p106 = scmp.ne.s32.totalorder %s94, %s95
      %p107 = scmp.eq.s32.totalorder %s22, 1
      %p108 = por %p106, %p107
      %p110 = scmp.ne.s32.totalorder %s95, %s109
      %p111 = scmp.eq.s32.totalorder %s22, 0
      %p112 = por %p110, %p111
      %s114 = sadd.s32 %s113, 1
      %p117 = scmp.eq.s32.totalorder %s16, 1
      %p118 = scmp.ne.s32.totalorder %s113, %s115
      %p119 = scmp.eq.s32.totalorder %s16, 0
      %p120 = por %p118, %p119
      %p121 = scmp.ne.s32.totalorder %s113, %s115
      %p122 = scmp.eq.s32.totalorder %s21, 1
      %p123 = por %p121, %p122
      %p124 = scmp.ne.s32.totalorder %s115, %s116
      %p125 = scmp.eq.s32.totalorder %s21, 0
      %p126 = por %p124, %p125
      %p127 = scmp.ne.s32.totalorder %s115, %s116
      %p128 = scmp.eq.s32.totalorder %s22, 1
      %p129 = por %p127, %p128
      %p131 = scmp.ne.s32.totalorder %s116, %s130
      %p132 = scmp.eq.s32.totalorder %s22, 0
      %p133 = por %p131, %p132
      %s135 = sadd.s32 %s134, 1
      %p138 = scmp.eq.s32.totalorder %s16, 1
      %p139 = scmp.ne.s32.totalorder %s134, %s136
      %p140 = scmp.eq.s32.totalorder %s16, 0
      %p141 = por %p139, %p140
      %p142 = scmp.ne.s32.totalorder %s134, %s136
      %p143 = scmp.eq.s32.totalorder %s21, 1
      %p144 = por %p142, %p143
      %p145 = scmp.ne.s32.totalorder %s136, %s137
      %p146 = scmp.eq.s32.totalorder %s21, 0
      %p147 = por %p145, %p146
      %p148 = scmp.ne.s32.totalorder %s136, %s137
      %p149 = scmp.eq.s32.totalorder %s22, 1
      %p150 = por %p148, %p149
      %p152 = scmp.ne.s32.totalorder %s137, %s151
      %p153 = scmp.eq.s32.totalorder %s22, 0
      %p154 = por %p152, %p153
      %s156 = sadd.s32 %s155, 1
      %p159 = scmp.eq.s32.totalorder %s16, 1
      %p160 = scmp.ne.s32.totalorder %s155, %s157
      %p161 = scmp.eq.s32.totalorder %s16, 0
      %p162 = por %p160, %p161
      %p163 = scmp.ne.s32.totalorder %s155, %s157
      %p164 = scmp.eq.s32.totalorder %s21, 1
      %p165 = por %p163, %p164
      %p166 = scmp.ne.s32.totalorder %s157, %s158
      %p167 = scmp.eq.s32.totalorder %s21, 0
      %p168 = por %p166, %p167
      %p169 = scmp.ne.s32.totalorder %s157, %s158
      %p170 = scmp.eq.s32.totalorder %s22, 1
      %p171 = por %p169, %p170
      %p173 = scmp.ne.s32.totalorder %s158, %s172
      %p174 = scmp.eq.s32.totalorder %s22, 0
      %p175 = por %p173, %p174
      %s176 = ssub.s32 %s16, %s23
      %p177 = scmp.eq.s32.totalorder %s176, 0
      %s179 = sadd.s32 %s178, 1
      %s180 = scalar_select %p177, %s178, %s179
      %p183 = pneg %p177
      %p184 = scmp.eq.s32.totalorder %s16, 1
      %p185 = por %p183, %p184
      %p186 = scmp.ne.s32.totalorder %s178, %s181
      %p187 = scmp.eq.s32.totalorder %s16, 0
      %p188 = por %p186, %p187
      %p189 = scmp.ne.s32.totalorder %s178, %s181
      %p190 = scmp.eq.s32.totalorder %s21, 1
      %p191 = por %p189, %p190
      %p192 = scmp.ne.s32.totalorder %s181, %s182
      %p193 = scmp.eq.s32.totalorder %s21, 0
      %p194 = por %p192, %p193
      %p195 = scmp.ne.s32.totalorder %s181, %s182
      %p196 = scmp.eq.s32.totalorder %s22, 1
      %p197 = por %p195, %p196
      %p199 = scmp.ne.s32.totalorder %s182, %s198
      %p200 = scmp.eq.s32.totalorder %s22, 0
      %p201 = por %p199, %p200
      %p202 = scmp.le.s32.totalorder 1, %s16
      %p203 = scmp.lt.s32.totalorder %s16, 3
      %p204 = pnand %p202, %p203
      %p205 = pneg %p204
      // Predicated region
      $region9: #{tpu_custom_call.1} parent=5 // pred_check
        _
      $region10: #{tpu_custom_call.1} parent=5 // pred_check_branch
        %207 = sbr.rel (%p204) target = $region12
      $region11: #{tpu_custom_call.1} parent=5 // pred_region
        %s208 = ssub.s32 %s16, 1
        // Predicated region
        $region13: #{tpu_custom_call.1} parent=11 // pred_check
          %p209 = pneg %p63
        $region14: #{tpu_custom_call.1} parent=11 // pred_check_branch
          %211 = sbr.rel (%p209) target = $region16
        $region15: #{tpu_custom_call.1} parent=11 // pred_region
          _
        $region16: #{tpu_custom_call.1} parent=11 // pred_fallthru
          _
        // Predicated region
        $region17: #{tpu_custom_call.1} parent=11 // pred_check
          %p212 = pneg %p84
        $region18: #{tpu_custom_call.1} parent=11 // pred_check_branch
          %214 = sbr.rel (%p212) target = $region20
        $region19: #{tpu_custom_call.1} parent=11 // pred_region
          _
        $region20: #{tpu_custom_call.1} parent=11 // pred_fallthru
          _
        // Predicated region
        $region21: #{tpu_custom_call.1} parent=11 // pred_check
          %p215 = pneg %p105
        $region22: #{tpu_custom_call.1} parent=11 // pred_check_branch
          %217 = sbr.rel (%p215) target = $region24
        $region23: #{tpu_custom_call.1} parent=11 // pred_region
          _
        $region24: #{tpu_custom_call.1} parent=11 // pred_fallthru
          _
        // Predicated region
        $region25: #{tpu_custom_call.1} parent=11 // pred_check
          %p218 = pneg %p126
        $region26: #{tpu_custom_call.1} parent=11 // pred_check_branch
          %220 = sbr.rel (%p218) target = $region28
        $region27: #{tpu_custom_call.1} parent=11 // pred_region
          _
        $region28: #{tpu_custom_call.1} parent=11 // pred_fallthru
          _
        // Predicated region
        $region29: #{tpu_custom_call.1} parent=11 // pred_check
          %p221 = pneg %p147
        $region30: #{tpu_custom_call.1} parent=11 // pred_check_branch
          %223 = sbr.rel (%p221) target = $region32
        $region31: #{tpu_custom_call.1} parent=11 // pred_region
          _
        $region32: #{tpu_custom_call.1} parent=11 // pred_fallthru
          _
        // Predicated region
        $region33: #{tpu_custom_call.1} parent=11 // pred_check
          %p224 = pneg %p168
        $region34: #{tpu_custom_call.1} parent=11 // pred_check_branch
          %226 = sbr.rel (%p224) target = $region36
        $region35: #{tpu_custom_call.1} parent=11 // pred_region
          _
        $region36: #{tpu_custom_call.1} parent=11 // pred_fallthru
          _
      $region12: #{tpu_custom_call.1} parent=5 // pred_fallthru
        _
      %p227 = scmp.lt.s32.totalorder %s16, 2
      // Predicated region
      $region37: #{tpu_custom_call.1} parent=5 // pred_check
        %p228 = pneg %p227
      $region38: #{tpu_custom_call.1} parent=5 // pred_check_branch
        %230 = sbr.rel (%p228) target = $region40
      $region39: #{tpu_custom_call.1} parent=5 // pred_region
        // Predicated region
        $region41: #{tpu_custom_call.1} parent=39 // pred_check
          %p231 = pneg %p36
        $region42: #{tpu_custom_call.1} parent=39 // pred_check_branch
          %233 = sbr.rel (%p231) target = $region44
        $region43: #{tpu_custom_call.1} parent=39 // pred_region
          %p234 = scmp.lt.s32.totalorder %s16, 1
          %s235 = scalar_select %p234, %s16, 1
          %s236 = smul.addr %s235, 4
          %s237 = smul.addr %s236, 8
          %s238 = scalar_lea.vmem %s0, %s237
        $region44: #{tpu_custom_call.1} parent=39 // pred_fallthru
          _
      $region40: #{tpu_custom_call.1} parent=5 // pred_fallthru
        _
      %p239 = scmp.le.s32.totalorder 1, %s16
      %p240 = scmp.lt.s32.totalorder %s16, 3
      %p241 = pnand %p239, %p240
      %p242 = pneg %p241
      // Predicated region
      $region45: #{tpu_custom_call.1} parent=5 // pred_check
        _
      $region46: #{tpu_custom_call.1} parent=5 // pred_check_branch
        %244 = sbr.rel (%p241) target = $region48
      $region47: #{tpu_custom_call.1} parent=5 // pred_region
        %s245 = ssub.s32 %s16, 1
        %p246 = scmp.lt.s32.totalorder %s21, 1
        %s247 = scalar_select %p246, %s21, 1
        %s248 = smul.addr %s247, 4
        %s249 = smul.addr %s248, 8
        %s250 = scalar_lea.vmem %s0, %s249
        %p251 = pneg %p42
        %p252 = pneg %p39
        %p253 = pneg %p63
        %p254 = pneg %p60
        %p255 = pneg %p84
        %p256 = pneg %p81
        %p257 = pneg %p105
        %p258 = pneg %p102
        %p259 = pneg %p126
        %p260 = pneg %p123
        %p261 = pneg %p147
        %p262 = pneg %p144
        %p263 = pneg %p168
        %p264 = pneg %p165
        %p265 = pneg %p194
        %p266 = pneg %p191
        %s267 = sand.u32 %s181, 1
        %s268 = scalar_lea.sflag [#allocation5], %s267
        %s269 = sand.u32 %s181, 1
        %s270 = smul.addr %s269, 32
        %s271 = scalar_lea.vmem [#allocation4], %s270
        %p272 = scmp.lt.s32.totalorder %s21, 1
        %s273 = scalar_select %p272, %s21, 1
        %s274 = smul.addr %s273, 4
        %s275 = smul.addr %s274, 8
        %s276 = scalar_lea.vmem %s0, %s275
        %v278 = vld [vmem:[%s276] sm:$0xff]
        %v279 = vld [vmem:[%s276 + $0x8] sm:$0xff]
        %v280 = vld [vmem:[%s276 + $0x10] sm:$0xff]
        %v281 = vld [vmem:[%s276 + $0x18] sm:$0xff]
        %282 = vadd.xlane.f32.xlu0 %v278
        %v283 = vpop.xlane.xlu0 %282
        %284 = vadd.xlane.f32.xlu0 %v279
        %v285 = vpop.xlane.xlu0 %284
        %286 = vadd.xlane.f32.xlu0 %v280
        %v287 = vpop.xlane.xlu0 %286
        %288 = vadd.xlane.f32.xlu0 %v281
        %v289 = vpop.xlane.xlu0 %288
        %v290 = vadd.f32 %v283, 0.0
        %v291 = vadd.f32 %v285, 0.0
        %v292 = vadd.f32 %v287, 0.0
        %v293 = vadd.f32 %v289, 0.0
        %v294 = vrcp.pop 64.0
        %v295 = vmul.f32 %v290, %v294
        %v296 = vmul.f32 %v291, %v294
        %v297 = vmul.f32 %v292, %v294
        %v298 = vmul.f32 %v293, %v294
        %v299 = vsub.f32 %v278, %v295
        %v300 = vsub.f32 %v279, %v296
        %v301 = vsub.f32 %v280, %v297
        %v302 = vsub.f32 %v281, %v298
        %v303 = vlaneseq
        %v304 = vand.u32 %v303, 127
        %vm305 = vcmp.lt.s32.totalorder %v304, 64
        %v306 = vsel %vm305, 1, 0
        %vm307 = vcmp.eq.s32.totalorder %v306, 1
        %v308 = vsel %vm307, %v299, 0.0
        %v309 = vsel %vm307, %v300, 0.0
        %v310 = vsel %vm307, %v301, 0.0
        %v311 = vsel %vm307, %v302, 0.0
        %v312 = vmul.f32 %v308, %v308
        %v313 = vmul.f32 %v309, %v309
        %v314 = vmul.f32 %v310, %v310
        %v315 = vmul.f32 %v311, %v311
        %316 = vadd.xlane.f32.xlu0 %v312
        %v317 = vpop.xlane.xlu0 %316
        %318 = vadd.xlane.f32.xlu0 %v313
        %v319 = vpop.xlane.xlu0 %318
        %320 = vadd.xlane.f32.xlu0 %v314
        %v321 = vpop.xlane.xlu0 %320
        %322 = vadd.xlane.f32.xlu0 %v315
        %v323 = vpop.xlane.xlu0 %322
        %v324 = vadd.f32 %v317, 0.0
        %v325 = vadd.f32 %v319, 0.0
        %v326 = vadd.f32 %v321, 0.0
        %v327 = vadd.f32 %v323, 0.0
        %v328 = vmul.f32 %v324, %v294
        %v329 = vmul.f32 %v325, %v294
        %v330 = vmul.f32 %v326, %v294
        %v331 = vmul.f32 %v327, %v294
        %v332 = vadd.f32 %v328, 1e-05
        %v333 = vadd.f32 %v329, 1e-05
        %v334 = vadd.f32 %v330, 1e-05
        %v335 = vadd.f32 %v331, 1e-05
        %v336 = vrsqrt.pop %v332
        %v337 = vrsqrt.pop %v333
        %v338 = vrsqrt.pop %v334
        %v339 = vrsqrt.pop %v335
        %v340 = vmul.f32 %v308, %v336
        %v341 = vmul.f32 %v309, %v337
        %v342 = vmul.f32 %v310, %v338
        %v343 = vmul.f32 %v311, %v339
        %v344 = vld [vmem:[%s1] sm:$0xff]
        %v345 = vld [vmem:[%s1 + $0x8] sm:$0xff]
        %v346 = vld [vmem:[%s1 + $0x10] sm:$0xff]
        %v347 = vld [vmem:[%s1 + $0x18] sm:$0xff]
        %349 = vset.pattern.permute.xlu0 0
        %350 = vperm.xlu0 %349, %v344
        %v351 = vpop.permute.xlu0 %350
        %354 = vset.pattern.permute.xlu0 0
        %355 = vperm.xlu0 %354, %v345
        %v356 = vpop.permute.xlu0 %355
        %359 = vset.pattern.permute.xlu0 0
        %360 = vperm.xlu0 %359, %v346
        %v361 = vpop.permute.xlu0 %360
        %364 = vset.pattern.permute.xlu0 0
        %365 = vperm.xlu0 %364, %v347
        %v366 = vpop.permute.xlu0 %365
        %v368 = vmul.f32 %v340, %v351
        %v369 = vmul.f32 %v341, %v356
        %v370 = vmul.f32 %v342, %v361
        %v371 = vmul.f32 %v343, %v366
        %v372 = vld [vmem:[%s2] sm:$0xff]
        %v373 = vld [vmem:[%s2 + $0x8] sm:$0xff]
        %v374 = vld [vmem:[%s2 + $0x10] sm:$0xff]
        %v375 = vld [vmem:[%s2 + $0x18] sm:$0xff]
        %377 = vset.pattern.permute.xlu0 0
        %378 = vperm.xlu0 %377, %v372
        %v379 = vpop.permute.xlu0 %378
        %382 = vset.pattern.permute.xlu0 0
        %383 = vperm.xlu0 %382, %v373
        %v384 = vpop.permute.xlu0 %383
        %387 = vset.pattern.permute.xlu0 0
        %388 = vperm.xlu0 %387, %v374
        %v389 = vpop.permute.xlu0 %388
        %392 = vset.pattern.permute.xlu0 0
        %393 = vperm.xlu0 %392, %v375
        %v394 = vpop.permute.xlu0 %393
        %v396 = vadd.f32 %v368, %v379
        %v397 = vadd.f32 %v369, %v384
        %v398 = vadd.f32 %v370, %v389
        %v399 = vadd.f32 %v371, %v394
        %v400 = vld [vmem:[%s3] sm:$0xf]
        %v401 = vld [vmem:[%s3 + $0x4] sm:$0xf]
        %v402 = vld [vmem:[%s3 + $0x8] sm:$0xf]
        %v403 = vld [vmem:[%s3 + $0xc] sm:$0xf]
        %v404 = vld [vmem:[%s3 + $0x10] sm:$0xf]
        %v405 = vld [vmem:[%s3 + $0x14] sm:$0xf]
        %v406 = vld [vmem:[%s3 + $0x18] sm:$0xf]
        %v407 = vld [vmem:[%s3 + $0x1c] sm:$0xf]
        %v408 = vld [vmem:[%s3 + $0x20] sm:$0xf]
        %v409 = vld [vmem:[%s3 + $0x24] sm:$0xf]
        %v410 = vld [vmem:[%s3 + $0x28] sm:$0xf]
        %v411 = vld [vmem:[%s3 + $0x2c] sm:$0xf]
        %v412 = vpack.c.bf16 %v397, %v396
        %v413 = vpack.c.bf16 %v399, %v398
        %v414 = vld [vmem:[%s4] sm:$0xff]
        %v415 = vld [vmem:[%s4 + $0x8] sm:$0xff]
        %v416 = vld [vmem:[%s4 + $0x10] sm:$0xff]
        %v417 = vld [vmem:[%s4 + $0x18] sm:$0xff]
        %v418 = vld [vmem:[%s4 + $0x20] sm:$0xff]
        %v419 = vld [vmem:[%s4 + $0x28] sm:$0xff]
        %v420 = vld [vmem:[%s4 + $0x30] sm:$0xff]
        %v421 = vld [vmem:[%s4 + $0x38] sm:$0xff]
        %v422 = vld [vmem:[%s4 + $0x40] sm:$0xff]
        %v423 = vld [vmem:[%s4 + $0x48] sm:$0xff]
        %v424 = vld [vmem:[%s4 + $0x50] sm:$0xff]
        %v425 = vld [vmem:[%s4 + $0x58] sm:$0xff]
        %427 = vset.pattern.permute.xlu0 0
        %428 = vperm.xlu0 %427, %v414
        %v429 = vpop.permute.xlu0 %428
        %432 = vset.pattern.permute.xlu0 0
        %433 = vperm.xlu0 %432, %v415
        %v434 = vpop.permute.xlu0 %433
        %437 = vset.pattern.permute.xlu0 0
        %438 = vperm.xlu0 %437, %v416
        %v439 = vpop.permute.xlu0 %438
        %442 = vset.pattern.permute.xlu0 0
        %443 = vperm.xlu0 %442, %v417
        %v444 = vpop.permute.xlu0 %443
        %447 = vset.pattern.permute.xlu0 0
        %448 = vperm.xlu0 %447, %v418
        %v449 = vpop.permute.xlu0 %448
        %452 = vset.pattern.permute.xlu0 0
        %453 = vperm.xlu0 %452, %v419
        %v454 = vpop.permute.xlu0 %453
        %457 = vset.pattern.permute.xlu0 0
        %458 = vperm.xlu0 %457, %v420
        %v459 = vpop.permute.xlu0 %458
        %462 = vset.pattern.permute.xlu0 0
        %463 = vperm.xlu0 %462, %v421
        %v464 = vpop.permute.xlu0 %463
        %467 = vset.pattern.permute.xlu0 0
        %468 = vperm.xlu0 %467, %v422
        %v469 = vpop.permute.xlu0 %468
        %472 = vset.pattern.permute.xlu0 0
        %473 = vperm.xlu0 %472, %v423
        %v474 = vpop.permute.xlu0 %473
        %477 = vset.pattern.permute.xlu0 0
        %478 = vperm.xlu0 %477, %v424
        %v479 = vpop.permute.xlu0 %478
        %482 = vset.pattern.permute.xlu0 0
        %483 = vperm.xlu0 %482, %v425
        %v484 = vpop.permute.xlu0 %483
        %v498 = vunpack.c.l.b16 %v400
        %v499 = vunpack.c.l.b16 %v401
        %v500 = vunpack.c.l.b16 %v402
        %v501 = vunpack.c.l.b16 %v403
        %v502 = vunpack.c.l.b16 %v404
        %v503 = vunpack.c.l.b16 %v405
        %v504 = vunpack.c.l.b16 %v406
        %v505 = vunpack.c.l.b16 %v407
        %v506 = vunpack.c.l.b16 %v408
        %v507 = vunpack.c.l.b16 %v409
        %v508 = vunpack.c.l.b16 %v410
        %v509 = vunpack.c.l.b16 %v411
        %v510 = vpack.c.b16 %v499, %v498
        %v511 = vpack.c.b16 %v501, %v500
        %v512 = vpack.c.b16 %v503, %v502
        %v513 = vpack.c.b16 %v505, %v504
        %v514 = vpack.c.b16 %v507, %v506
        %v515 = vpack.c.b16 %v509, %v508
        %vm516 = vcmask 261120
        %v518 = vsel %vm516, %v510, 0
        %v521 = vsel %vm516, %v511, 0
        %v524 = vsel %vm516, %v512, 0
        %v527 = vsel %vm516, %v513, 0
        %v530 = vsel %vm516, %v514, 0
        %v533 = vsel %vm516, %v515, 0
        %535 = vmatprep.subr.bf16.mxu0 0
        %536 = vmatpush1.bf16.msra.mxu0 %v412
        %537 = vmatprep.subr.bf16.mxu0 0
        %538 = vmatpush1.bf16.msra.mxu0 %v413
        %539 = vmatprep.subr.bf16.mxu0 0
        %540 = vmatpush1.bf16.msra.mxu0 0
        %541 = vmatprep.subr.bf16.mxu0 0
        %542 = vmatpush1.bf16.msra.mxu0 0
        %543 = vmatprep.subr.bf16.mxu0 0
        %544 = vmatpush1.bf16.msra.mxu0 0
        %545 = vmatprep.subr.bf16.mxu0 0
        %546 = vmatpush1.bf16.msra.mxu0 0
        %547 = vmatprep.subr.bf16.mxu0 0
        %548 = vmatpush1.bf16.msra.mxu0 0
        %549 = vmatprep.subr.bf16.mxu0 0
        %550 = vmatpush1.bf16.msra.mxu0 0
        %551 = vmatprep.subr.bf16.mxu0 0
        %552 = vmatpush1.bf16.msra.mxu0 0
        %553 = vmatprep.subr.bf16.mxu0 0
        %554 = vmatpush1.bf16.msra.mxu0 0
        %555 = vmatprep.subr.bf16.mxu0 0
        %556 = vmatpush1.bf16.msra.mxu0 0
        %557 = vmatprep.subr.bf16.mxu0 0
        %558 = vmatpush1.bf16.msra.mxu0 0
        %559 = vmatprep.subr.bf16.mxu0 0
        %560 = vmatpush1.bf16.msra.mxu0 0
        %561 = vmatprep.subr.bf16.mxu0 0
        %562 = vmatpush1.bf16.msra.mxu0 0
        %563 = vmatprep.subr.bf16.mxu0 0
        %564 = vmatpush1.bf16.msra.mxu0 0
        %565 = vmatprep.subr.bf16.mxu0 0
        %566 = vmatpush1.bf16.msra.mxu0 0
        %567 = vmatprep.mubr.bf16.mxu0 0
        %568 = vmatmul.mubr.bf16.gmra.mrb[0].mxu0 %v518
        %v569 = vpop.f32.mrb[0].mxu0
        %v570 = vadd.f32 %v429, %v569
        %v571 = vpop.f32.mrb[0].mxu0
        %v572 = vpop.f32.mrb[0].mxu0
        %v573 = vadd.f32 %v434, %v572
        %v574 = vpop.f32.mrb[0].mxu0
        %575 = vmatprep.mubr.bf16.mxu0 0
        %576 = vmatmul.mubr.bf16.gmra.mrb[0].mxu0 %v521
        %v577 = vpop.f32.mrb[0].mxu0
        %v578 = vadd.f32 %v439, %v577
        %v579 = vpop.f32.mrb[0].mxu0
        %v580 = vpop.f32.mrb[0].mxu0
        %v581 = vadd.f32 %v444, %v580
        %v582 = vpop.f32.mrb[0].mxu0
        %583 = vmatprep.mubr.bf16.mxu0 0
        %584 = vmatmul.mubr.bf16.gmra.mrb[0].mxu0 %v524
        %v585 = vpop.f32.mrb[0].mxu0
        %v586 = vadd.f32 %v449, %v585
        %v587 = vpop.f32.mrb[0].mxu0
        %v588 = vpop.f32.mrb[0].mxu0
        %v589 = vadd.f32 %v454, %v588
        %v590 = vpop.f32.mrb[0].mxu0
        %591 = vmatprep.mubr.bf16.mxu0 0
        %592 = vmatmul.mubr.bf16.gmra.mrb[0].mxu0 %v527
        %v593 = vpop.f32.mrb[0].mxu0
        %v594 = vadd.f32 %v459, %v593
        %v595 = vpop.f32.mrb[0].mxu0
        %v596 = vpop.f32.mrb[0].mxu0
        %v597 = vadd.f32 %v464, %v596
        %v598 = vpop.f32.mrb[0].mxu0
        %599 = vmatprep.mubr.bf16.mxu0 0
        %600 = vmatmul.mubr.bf16.gmra.mrb[0].mxu0 %v530
        %v601 = vpop.f32.mrb[0].mxu0
        %v602 = vadd.f32 %v469, %v601
        %v603 = vpop.f32.mrb[0].mxu0
        %v604 = vpop.f32.mrb[0].mxu0
        %v605 = vadd.f32 %v474, %v604
        %v606 = vpop.f32.mrb[0].mxu0
        %607 = vmatprep.mubr.bf16.mxu0 0
        %608 = vmatmul.mubr.bf16.gmra.mrb[0].mxu0 %v533
        %v609 = vpop.f32.mrb[0].mxu0
        %v610 = vadd.f32 %v479, %v609
        %v611 = vpop.f32.mrb[0].mxu0
        %v612 = vpop.f32.mrb[0].mxu0
        %v613 = vadd.f32 %v484, %v612
        %v614 = vpop.f32.mrb[0].mxu0
        %615 = vdwg.mxu0
        %v616 = vpack.c.bf16 %v573, %v570
        %v617 = vpack.c.bf16 %v581, %v578
        %v618 = vpack.c.bf16 %v589, %v586
        %v619 = vpack.c.bf16 %v597, %v594
        %v620 = vpack.c.bf16 %v605, %v602
        %v621 = vpack.c.bf16 %v613, %v610
        %622 = vst [vmem:[#allocation2] sm:$0xff] %v616
        %623 = vst [vmem:[#allocation2 + $0x8] sm:$0xff] %v617
        %624 = vst [vmem:[#allocation2 + $0x10] sm:$0xff] %v618
        %625 = vst [vmem:[#allocation2 + $0x18] sm:$0xff] %v619
        %626 = vst [vmem:[#allocation2 + $0x20] sm:$0xff] %v620
        %627 = vst [vmem:[#allocation2 + $0x28] sm:$0xff] %v621
        %v628 = vlaneseq
        %v629 = vshrl.u32 %v628, 7
        %v630 = vadd.s32 %v629, 8
        %v631 = vadd.s32 %v629, 16
        %v632 = vadd.s32 %v629, 24
        %v633 = vadd.s32 %v629, 32
        %v634 = vadd.s32 %v629, 40
        %v635 = vadd.s32 %v629, 48
        %v636 = vadd.s32 %v629, 56
        %v637 = vadd.s32 %v629, 64
        %v638 = vadd.s32 %v629, 72
        %v639 = vadd.s32 %v629, 80
        %v640 = vadd.s32 %v629, 88
        %v641 = vadd.s32 %v629, 96
        %v642 = vadd.s32 %v629, 104
        %v643 = vadd.s32 %v629, 112
        %v644 = vadd.s32 %v629, 120
        %vm645 = vcmp.lt.s32.totalorder %v629, 64
        %vm646 = vcmp.lt.s32.totalorder %v630, 64
        %vm647 = vcmp.lt.s32.totalorder %v631, 64
        %vm648 = vcmp.lt.s32.totalorder %v632, 64
        %vm649 = vcmp.lt.s32.totalorder %v633, 64
        %vm650 = vcmp.lt.s32.totalorder %v634, 64
        %vm651 = vcmp.lt.s32.totalorder %v635, 64
        %vm652 = vcmp.lt.s32.totalorder %v636, 64
        %vm653 = vcmp.lt.s32.totalorder %v637, 64
        %vm654 = vcmp.lt.s32.totalorder %v638, 64
        %vm655 = vcmp.lt.s32.totalorder %v639, 64
        %vm656 = vcmp.lt.s32.totalorder %v640, 64
        %vm657 = vcmp.lt.s32.totalorder %v641, 64
        %vm658 = vcmp.lt.s32.totalorder %v642, 64
        %vm659 = vcmp.lt.s32.totalorder %v643, 64
        %vm660 = vcmp.lt.s32.totalorder %v644, 64
        loop: start=0, step=1, limit=2
        $region49: #{tpu_custom_call.1} parent=47 // loop_pre_header
          _
        $region50: #{tpu_custom_call.1} parent=47 // loop_header
          %s662 = sphi 0, %s666
          %p663 = scmp.ge.s32.totalorder %s662, 2
        $region51: #{tpu_custom_call.1} parent=47 // loop_header_branch
          %665 = sbr.rel (%p663) target = $region55
        $region52: #{tpu_custom_call.1} parent=47 // loop_body
          %s667 = smul.u32 %s662, 16
          %s668 = sadd.s32 %s667, 32
          %s669 = sadd.s32 %s667, 64
          %s670 = sshra.s32 %s667, 4
          %s671 = sand.u32 %s667, 15
          %s672 = smul.addr %s670, 8
          %s673 = scalar_lea.vmem [#allocation2], %s672
          %v674 = vld [vmem:[%s673] sm:$0xff]
          %s675 = sshra.s32 %s668, 4
          %s676 = sand.u32 %s668, 15
          %s677 = smul.addr %s675, 8
          %s678 = scalar_lea.vmem [#allocation2], %s677
          %v679 = vld [vmem:[%s678] sm:$0xff]
          %s680 = sshra.s32 %s669, 4
          %s681 = sand.u32 %s669, 15
          %s682 = smul.addr %s680, 8
          %s683 = scalar_lea.vmem [#allocation2], %s682
          %v684 = vld [vmem:[%s683] sm:$0xff]
          %685 = vxpose.xlu0.c.b16.start [1/8] %v679, 128
          %686 = vxpose.xlu0.c.b16.cont [2/8] 0, 128
          %687 = vxpose.xlu0.c.b16.cont [3/8] 0, 128
          %688 = vxpose.xlu0.c.b16.cont [4/8] 0, 128
          %689 = vxpose.xlu0.c.b16.cont [5/8] 0, 128
          %690 = vxpose.xlu0.c.b16.cont [6/8] 0, 128
          %691 = vxpose.xlu0.c.b16.cont [7/8] 0, 128
          %692 = vxpose.xlu0.c.b16.end [8/8] 0, 128
          %v693 = vpop.trf.xlu0
          %v694 = vpop.trf.xlu0
          %v695 = vpop.trf.xlu0
          %v696 = vpop.trf.xlu0
          %v697 = vpop.trf.xlu0
          %v698 = vpop.trf.xlu0
          %v699 = vpop.trf.xlu0
          %v700 = vpop.trf.xlu0
          %vm701 = vcmask 130048
          %v703 = vsel %vm701, %v693, 0
          %v706 = vsel %vm701, %v694, 0
          %v709 = vsel %vm701, %v695, 0
          %v712 = vsel %vm701, %v696, 0
          %v715 = vsel %vm701, %v697, 0
          %v718 = vsel %vm701, %v698, 0
          %v721 = vsel %vm701, %v699, 0
          %v724 = vsel %vm701, %v700, 0
          %726 = vmatprep.subr.bf16.mxu0 0
          %727 = vmatpush1.bf16.msra.mxu0 %v674
          %728 = vmatprep.subr.bf16.mxu0 0
          %729 = vmatpush1.bf16.msra.mxu0 0
          %730 = vmatprep.subr.bf16.mxu0 0
          %731 = vmatpush1.bf16.msra.mxu0 0
          %732 = vmatprep.subr.bf16.mxu0 0
          %733 = vmatpush1.bf16.msra.mxu0 0
          %734 = vmatprep.subr.bf16.mxu0 0
          %735 = vmatpush1.bf16.msra.mxu0 0
          %736 = vmatprep.subr.bf16.mxu0 0
          %737 = vmatpush1.bf16.msra.mxu0 0
          %738 = vmatprep.subr.bf16.mxu0 0
          %739 = vmatpush1.bf16.msra.mxu0 0
          %740 = vmatprep.subr.bf16.mxu0 0
          %741 = vmatpush1.bf16.msra.mxu0 0
          %742 = vmatprep.subr.bf16.mxu0 0
          %743 = vmatpush1.bf16.msra.mxu0 0
          %744 = vmatprep.subr.bf16.mxu0 0
          %745 = vmatpush1.bf16.msra.mxu0 0
          %746 = vmatprep.subr.bf16.mxu0 0
          %747 = vmatpush1.bf16.msra.mxu0 0
          %748 = vmatprep.subr.bf16.mxu0 0
          %749 = vmatpush1.bf16.msra.mxu0 0
          %750 = vmatprep.subr.bf16.mxu0 0
          %751 = vmatpush1.bf16.msra.mxu0 0
          %752 = vmatprep.subr.bf16.mxu0 0
          %753 = vmatpush1.bf16.msra.mxu0 0
          %754 = vmatprep.subr.bf16.mxu0 0
          %755 = vmatpush1.bf16.msra.mxu0 0
          %756 = vmatprep.subr.bf16.mxu0 0
          %757 = vmatpush1.bf16.msra.mxu0 0
          %758 = vmatprep.mubr.bf16.mxu0 0
          %759 = vmatmul.mubr.bf16.gmra.mrb[0].mxu0 %v703
          %v760 = vpop.f32.mrb[0].mxu0
          %v761 = vadd.f32 0.0, %v760
          %v762 = vpop.f32.mrb[0].mxu0
          %v763 = vpop.f32.mrb[0].mxu0
          %v764 = vadd.f32 0.0, %v763
          %v765 = vpop.f32.mrb[0].mxu0
          %766 = vmatprep.mubr.bf16.mxu0 0
          %767 = vmatmul.mubr.bf16.gmra.mrb[0].mxu0 %v706
          %v768 = vpop.f32.mrb[0].mxu0
          %v769 = vadd.f32 0.0, %v768
          %v770 = vpop.f32.mrb[0].mxu0
          %v771 = vpop.f32.mrb[0].mxu0
          %v772 = vadd.f32 0.0, %v771
          %v773 = vpop.f32.mrb[0].mxu0
          %774 = vmatprep.mubr.bf16.mxu0 0
          %775 = vmatmul.mubr.bf16.gmra.mrb[0].mxu0 %v709
          %v776 = vpop.f32.mrb[0].mxu0
          %v777 = vadd.f32 0.0, %v776
          %v778 = vpop.f32.mrb[0].mxu0
          %v779 = vpop.f32.mrb[0].mxu0
          %v780 = vadd.f32 0.0, %v779
          %v781 = vpop.f32.mrb[0].mxu0
          %782 = vmatprep.mubr.bf16.mxu0 0
          %783 = vmatmul.mubr.bf16.gmra.mrb[0].mxu0 %v712
          %v784 = vpop.f32.mrb[0].mxu0
          %v785 = vadd.f32 0.0, %v784
          %v786 = vpop.f32.mrb[0].mxu0
          %v787 = vpop.f32.mrb[0].mxu0
          %v788 = vadd.f32 0.0, %v787
          %v789 = vpop.f32.mrb[0].mxu0
          %790 = vmatprep.mubr.bf16.mxu0 0
          %791 = vmatmul.mubr.bf16.gmra.mrb[0].mxu0 %v715
          %v792 = vpop.f32.mrb[0].mxu0
          %v793 = vadd.f32 0.0, %v792
          %v794 = vpop.f32.mrb[0].mxu0
          %v795 = vpop.f32.mrb[0].mxu0
          %v796 = vadd.f32 0.0, %v795
          %v797 = vpop.f32.mrb[0].mxu0
          %798 = vmatprep.mubr.bf16.mxu0 0
          %799 = vmatmul.mubr.bf16.gmra.mrb[0].mxu0 %v718
          %v800 = vpop.f32.mrb[0].mxu0
          %v801 = vadd.f32 0.0, %v800
          %v802 = vpop.f32.mrb[0].mxu0
          %v803 = vpop.f32.mrb[0].mxu0
          %v804 = vadd.f32 0.0, %v803
          %v805 = vpop.f32.mrb[0].mxu0
          %806 = vmatprep.mubr.bf16.mxu0 0
          %807 = vmatmul.mubr.bf16.gmra.mrb[0].mxu0 %v721
          %v808 = vpop.f32.mrb[0].mxu0
          %v809 = vadd.f32 0.0, %v808
          %v810 = vpop.f32.mrb[0].mxu0
          %v811 = vpop.f32.mrb[0].mxu0
          %v812 = vadd.f32 0.0, %v811
          %v813 = vpop.f32.mrb[0].mxu0
          %814 = vmatprep.mubr.bf16.mxu0 0
          %815 = vmatmul.mubr.bf16.gmra.mrb[0].mxu0 %v724
          %v816 = vpop.f32.mrb[0].mxu0
          %v817 = vadd.f32 0.0, %v816
          %v818 = vpop.f32.mrb[0].mxu0
          %v819 = vpop.f32.mrb[0].mxu0
          %v820 = vadd.f32 0.0, %v819
          %v821 = vpop.f32.mrb[0].mxu0
          %822 = vdwg.mxu0
          %v823 = vsel %vm645, 1, 0
          %v824 = vsel %vm646, 1, 0
          %v825 = vsel %vm647, 1, 0
          %v826 = vsel %vm648, 1, 0
          %v827 = vsel %vm649, 1, 0
          %v828 = vsel %vm650, 1, 0
          %v829 = vsel %vm651, 1, 0
          %v830 = vsel %vm652, 1, 0
          %v831 = vsel %vm653, 1, 0
          %v832 = vsel %vm654, 1, 0
          %v833 = vsel %vm655, 1, 0
          %v834 = vsel %vm656, 1, 0
          %v835 = vsel %vm657, 1, 0
          %v836 = vsel %vm658, 1, 0
          %v837 = vsel %vm659, 1, 0
          %v838 = vsel %vm660, 1, 0
          %vm839 = vcmp.eq.s32.totalorder %v823, 1
          %vm840 = vcmp.eq.s32.totalorder %v824, 1
          %vm841 = vcmp.eq.s32.totalorder %v825, 1
          %vm842 = vcmp.eq.s32.totalorder %v826, 1
          %vm843 = vcmp.eq.s32.totalorder %v827, 1
          %vm844 = vcmp.eq.s32.totalorder %v828, 1
          %vm845 = vcmp.eq.s32.totalorder %v829, 1
          %vm846 = vcmp.eq.s32.totalorder %v830, 1
          %vm847 = vcmp.eq.s32.totalorder %v831, 1
          %vm848 = vcmp.eq.s32.totalorder %v832, 1
          %vm849 = vcmp.eq.s32.totalorder %v833, 1
          %vm850 = vcmp.eq.s32.totalorder %v834, 1
          %vm851 = vcmp.eq.s32.totalorder %v835, 1
          %vm852 = vcmp.eq.s32.totalorder %v836, 1
          %vm853 = vcmp.eq.s32.totalorder %v837, 1
          %vm854 = vcmp.eq.s32.totalorder %v838, 1
          %v855 = vsel %vm839, %v761, -inf
          %v856 = vsel %vm840, %v764, -inf
          %v857 = vsel %vm841, %v769, -inf
          %v858 = vsel %vm842, %v772, -inf
          %v859 = vsel %vm843, %v777, -inf
          %v860 = vsel %vm844, %v780, -inf
          %v861 = vsel %vm845, %v785, -inf
          %v862 = vsel %vm846, %v788, -inf
          %v863 = vsel %vm847, %v793, -inf
          %v864 = vsel %vm848, %v796, -inf
          %v865 = vsel %vm849, %v801, -inf
          %v866 = vsel %vm850, %v804, -inf
          %v867 = vsel %vm851, %v809, -inf
          %v868 = vsel %vm852, %v812, -inf
          %v869 = vsel %vm853, %v817, -inf
          %v870 = vsel %vm854, %v820, -inf
          %v871 = vmax.f32 %v855, %v859
          %v872 = vmax.f32 %v856, %v860
          %v873 = vmax.f32 %v857, %v861
          %v874 = vmax.f32 %v858, %v862
          %v875 = vmax.f32 %v871, %v863
          %v876 = vmax.f32 %v872, %v864
          %v877 = vmax.f32 %v873, %v865
          %v878 = vmax.f32 %v874, %v866
          %v879 = vmax.f32 %v875, %v867
          %v880 = vmax.f32 %v876, %v868
          %v881 = vmax.f32 %v877, %v869
          %v882 = vmax.f32 %v878, %v870
          %v883 = vmax.f32 %v879, %v880
          %v884 = vmax.f32 %v881, %v882
          %v885 = vmax.f32 %v883, %v884
          %v886 = vrot.slane %v885, 4
          %v887 = vmax.f32 %v885, %v886
          %v888 = vrot.slane %v887, 2
          %v889 = vmax.f32 %v887, %v888
          %v890 = vrot.slane %v889, 1
          %v891 = vmax.f32 %v889, %v890
          %v892 = vsub.f32 %v855, %v891
          %v893 = vsub.f32 %v856, %v891
          %v894 = vsub.f32 %v857, %v891
          %v895 = vsub.f32 %v858, %v891
          %v896 = vsub.f32 %v859, %v891
          %v897 = vsub.f32 %v860, %v891
          %v898 = vsub.f32 %v861, %v891
          %v899 = vsub.f32 %v862, %v891
          %v900 = vsub.f32 %v863, %v891
          %v901 = vsub.f32 %v864, %v891
          %v902 = vsub.f32 %v865, %v891
          %v903 = vsub.f32 %v866, %v891
          %v904 = vsub.f32 %v867, %v891
          %v905 = vsub.f32 %v868, %v891
          %v906 = vsub.f32 %v869, %v891
          %v907 = vsub.f32 %v870, %v891
          %v908 = vmul.f32 %v892, 1.442695
          %v909 = vpow.pop %v908
          %v910 = vmul.f32 %v893, 1.442695
          %v911 = vpow.pop %v910
          %v912 = vmul.f32 %v894, 1.442695
          %v913 = vpow.pop %v912
          %v914 = vmul.f32 %v895, 1.442695
          %v915 = vpow.pop %v914
          %v916 = vmul.f32 %v896, 1.442695
          %v917 = vpow.pop %v916
          %v918 = vmul.f32 %v897, 1.442695
          %v919 = vpow.pop %v918
          %v920 = vmul.f32 %v898, 1.442695
          %v921 = vpow.pop %v920
          %v922 = vmul.f32 %v899, 1.442695
          %v923 = vpow.pop %v922
          %v924 = vmul.f32 %v900, 1.442695
          %v925 = vpow.pop %v924
          %v926 = vmul.f32 %v901, 1.442695
          %v927 = vpow.pop %v926
          %v928 = vmul.f32 %v902, 1.442695
          %v929 = vpow.pop %v928
          %v930 = vmul.f32 %v903, 1.442695
          %v931 = vpow.pop %v930
          %v932 = vmul.f32 %v904, 1.442695
          %v933 = vpow.pop %v932
          %v934 = vmul.f32 %v905, 1.442695
          %v935 = vpow.pop %v934
          %v936 = vmul.f32 %v906, 1.442695
          %v937 = vpow.pop %v936
          %v938 = vmul.f32 %v907, 1.442695
          %v939 = vpow.pop %v938
          %v940 = vadd.f32 %v909, %v911
          %v941 = vadd.f32 %v940, %v913
          %v942 = vadd.f32 %v941, %v915
          %v943 = vadd.f32 %v942, %v917
          %v944 = vadd.f32 %v943, %v919
          %v945 = vadd.f32 %v944, %v921
          %v946 = vadd.f32 %v945, %v923
          %v947 = vadd.f32 %v946, %v925
          %v948 = vadd.f32 %v947, %v927
          %v949 = vadd.f32 %v948, %v929
          %v950 = vadd.f32 %v949, %v931
          %v951 = vadd.f32 %v950, %v933
          %v952 = vadd.f32 %v951, %v935
          %v953 = vadd.f32 %v952, %v937
          %v954 = vadd.f32 %v953, %v939
          %v955 = vrot.slane %v954, 4
          %v956 = vadd.f32 %v954, %v955
          %v957 = vrot.slane %v956, 2
          %v958 = vadd.f32 %v956, %v957
          %v959 = vrot.slane %v958, 1
          %v960 = vadd.f32 %v958, %v959
          %v961 = vpack.c.bf16 %v911, %v909
          %v962 = vpack.c.bf16 %v915, %v913
          %v963 = vpack.c.bf16 %v919, %v917
          %v964 = vpack.c.bf16 %v923, %v921
          %v965 = vpack.c.bf16 %v927, %v925
          %v966 = vpack.c.bf16 %v931, %v929
          %v967 = vpack.c.bf16 %v935, %v933
          %v968 = vpack.c.bf16 %v939, %v937
          %969 = vmatprep.subr.bf16.mxu0 0
          %970 = vmatpush1.bf16.msra.mxu0 %v961
          %971 = vmatprep.subr.bf16.mxu0 0
          %972 = vmatpush1.bf16.msra.mxu0 %v962
          %973 = vmatprep.subr.bf16.mxu0 0
          %974 = vmatpush1.bf16.msra.mxu0 %v963
          %975 = vmatprep.subr.bf16.mxu0 0
          %976 = vmatpush1.bf16.msra.mxu0 %v964
          %977 = vmatprep.subr.bf16.mxu0 0
          %978 = vmatpush1.bf16.msra.mxu0 %v965
          %979 = vmatprep.subr.bf16.mxu0 0
          %980 = vmatpush1.bf16.msra.mxu0 %v966
          %981 = vmatprep.subr.bf16.mxu0 0
          %982 = vmatpush1.bf16.msra.mxu0 %v967
          %983 = vmatprep.subr.bf16.mxu0 0
          %984 = vmatpush1.bf16.msra.mxu0 %v968
          %985 = vmatprep.subr.bf16.mxu0 0
          %986 = vmatpush1.bf16.msra.mxu0 0
          %987 = vmatprep.subr.bf16.mxu0 0
          %988 = vmatpush1.bf16.msra.mxu0 0
          %989 = vmatprep.subr.bf16.mxu0 0
          %990 = vmatpush1.bf16.msra.mxu0 0
          %991 = vmatprep.subr.bf16.mxu0 0
          %992 = vmatpush1.bf16.msra.mxu0 0
          %993 = vmatprep.subr.bf16.mxu0 0
          %994 = vmatpush1.bf16.msra.mxu0 0
          %995 = vmatprep.subr.bf16.mxu0 0
          %996 = vmatpush1.bf16.msra.mxu0 0
          %997 = vmatprep.subr.bf16.mxu0 0
          %998 = vmatpush1.bf16.msra.mxu0 0
          %999 = vmatprep.subr.bf16.mxu0 0
          %1000 = vmatpush1.bf16.msra.mxu0 0
          %1001 = vmatprep.mubr.bf16.mxu0 0
          %1002 = vmatmul.mubr.bf16.gmra.mrb[0].mxu0 %v684
          %v1003 = vpop.f32.mrb[0].mxu0
          %v1004 = vadd.f32 0.0, %v1003
          %v1005 = vpop.f32.mrb[0].mxu0
          %v1006 = vpop.f32.mrb[0].mxu0
          %v1007 = vadd.f32 0.0, %v1006
          %v1008 = vpop.f32.mrb[0].mxu0
          %1009 = vdwg.mxu0
          %v1010 = vrcp.pop %v960
          %v1011 = vmul.f32 %v1004, %v1010
          %v1012 = vmul.f32 %v1007, %v1010
          %s1013 = scalar_lea.vmem [#allocation3], %s667
          %1014 = vst [vmem:[%s1013] sm:$0xff] %v1011
          %1015 = vst [vmem:[%s1013 + $0x8] sm:$0xff] %v1012
        $region53: #{tpu_custom_call.1} parent=47 // loop_footer
          %s666 = sadd.s32 1, %s662
        $region54: #{tpu_custom_call.1} parent=47 // loop_footer_branch
          %661 = sbr.rel target = $region50
        $region55: #{tpu_custom_call.1} parent=47 // loop_exit
          _
        %v1016 = vld [vmem:[%s5] sm:$0xf]
        %v1017 = vld [vmem:[%s5 + $0x4] sm:$0xf]
        %v1018 = vld [vmem:[%s5 + $0x8] sm:$0xf]
        %v1019 = vld [vmem:[%s5 + $0xc] sm:$0xf]
        %v1020 = vld [vmem:[#allocation3] sm:$0xff]
        %v1021 = vld [vmem:[#allocation3 + $0x8] sm:$0xff]
        %v1022 = vld [vmem:[#allocation3 + $0x10] sm:$0xff]
        %v1023 = vld [vmem:[#allocation3 + $0x18] sm:$0xff]
        %v1024 = vpack.c.bf16 %v1021, %v1020
        %v1025 = vpack.c.bf16 %v1023, %v1022
        %v1026 = vld [vmem:[%s6] sm:$0xff]
        %v1027 = vld [vmem:[%s6 + $0x8] sm:$0xff]
        %v1028 = vld [vmem:[%s6 + $0x10] sm:$0xff]
        %v1029 = vld [vmem:[%s6 + $0x18] sm:$0xff]
        %1031 = vset.pattern.permute.xlu0 0
        %1032 = vperm.xlu0 %1031, %v1026
        %v1033 = vpop.permute.xlu0 %1032
        %1036 = vset.pattern.permute.xlu0 0
        %1037 = vperm.xlu0 %1036, %v1027
        %v1038 = vpop.permute.xlu0 %1037
        %1041 = vset.pattern.permute.xlu0 0
        %1042 = vperm.xlu0 %1041, %v1028
        %v1043 = vpop.permute.xlu0 %1042
        %1046 = vset.pattern.permute.xlu0 0
        %1047 = vperm.xlu0 %1046, %v1029
        %v1048 = vpop.permute.xlu0 %1047
        %v1054 = vunpack.c.l.b16 %v1016
        %v1055 = vunpack.c.l.b16 %v1017
        %v1056 = vunpack.c.l.b16 %v1018
        %v1057 = vunpack.c.l.b16 %v1019
        %v1058 = vpack.c.b16 %v1055, %v1054
        %v1059 = vpack.c.b16 %v1057, %v1056
        %v1061 = vsel %vm516, %v1058, 0
        %v1064 = vsel %vm516, %v1059, 0
        %1066 = vmatprep.subr.bf16.mxu0 0
        %1067 = vmatpush1.bf16.msra.mxu0 %v1024
        %1068 = vmatprep.subr.bf16.mxu0 0
        %1069 = vmatpush1.bf16.msra.mxu0 %v1025
        %1070 = vmatprep.subr.bf16.mxu0 0
        %1071 = vmatpush1.bf16.msra.mxu0 0
        %1072 = vmatprep.subr.bf16.mxu0 0
        %1073 = vmatpush1.bf16.msra.mxu0 0
        %1074 = vmatprep.subr.bf16.mxu0 0
        %1075 = vmatpush1.bf16.msra.mxu0 0
        %1076 = vmatprep.subr.bf16.mxu0 0
        %1077 = vmatpush1.bf16.msra.mxu0 0
        %1078 = vmatprep.subr.bf16.mxu0 0
        %1079 = vmatpush1.bf16.msra.mxu0 0
        %1080 = vmatprep.subr.bf16.mxu0 0
        %1081 = vmatpush1.bf16.msra.mxu0 0
        %1082 = vmatprep.subr.bf16.mxu0 0
        %1083 = vmatpush1.bf16.msra.mxu0 0
        %1084 = vmatprep.subr.bf16.mxu0 0
        %1085 = vmatpush1.bf16.msra.mxu0 0
        %1086 = vmatprep.subr.bf16.mxu0 0
        %1087 = vmatpush1.bf16.msra.mxu0 0
        %1088 = vmatprep.subr.bf16.mxu0 0
        %1089 = vmatpush1.bf16.msra.mxu0 0
        %1090 = vmatprep.subr.bf16.mxu0 0
        %1091 = vmatpush1.bf16.msra.mxu0 0
        %1092 = vmatprep.subr.bf16.mxu0 0
        %1093 = vmatpush1.bf16.msra.mxu0 0
        %1094 = vmatprep.subr.bf16.mxu0 0
        %1095 = vmatpush1.bf16.msra.mxu0 0
        %1096 = vmatprep.subr.bf16.mxu0 0
        %1097 = vmatpush1.bf16.msra.mxu0 0
        %1098 = vmatprep.mubr.bf16.mxu0 0
        %1099 = vmatmul.mubr.bf16.gmra.mrb[0].mxu0 %v1061
        %v1100 = vpop.f32.mrb[0].mxu0
        %v1101 = vadd.f32 %v1033, %v1100
        %v1102 = vpop.f32.mrb[0].mxu0
        %v1103 = vpop.f32.mrb[0].mxu0
        %v1104 = vadd.f32 %v1038, %v1103
        %v1105 = vpop.f32.mrb[0].mxu0
        %1106 = vmatprep.mubr.bf16.mxu0 0
        %1107 = vmatmul.mubr.bf16.gmra.mrb[0].mxu0 %v1064
        %v1108 = vpop.f32.mrb[0].mxu0
        %v1109 = vadd.f32 %v1043, %v1108
        %v1110 = vpop.f32.mrb[0].mxu0
        %v1111 = vpop.f32.mrb[0].mxu0
        %v1112 = vadd.f32 %v1048, %v1111
        %v1113 = vpop.f32.mrb[0].mxu0
        %1114 = vdwg.mxu0
        %v1115 = vadd.f32 %v278, %v1101
        %v1116 = vadd.f32 %v279, %v1104
        %v1117 = vadd.f32 %v280, %v1109
        %v1118 = vadd.f32 %v281, %v1112
        %1119 = vst [vmem:[%s271] sm:$0xff] %v1115
        %1120 = vst [vmem:[%s271 + $0x8] sm:$0xff] %v1116
        %1121 = vst [vmem:[%s271 + $0x10] sm:$0xff] %v1117
        %1122 = vst [vmem:[%s271 + $0x18] sm:$0xff] %v1118
        %s1123 = sand.u32 %s181, 1
        %s1124 = scalar_lea.sflag [#allocation5], %s1123
        %s1125 = sand.u32 %s181, 1
        %s1126 = smul.addr %s1125, 32
        %s1127 = scalar_lea.vmem [#allocation4], %s1126
        // Predicated region
        $region56: #{tpu_custom_call.1} parent=47 // pred_check
          %p1128 = pneg %p191
        $region57: #{tpu_custom_call.1} parent=47 // pred_check_branch
          %1130 = sbr.rel (%p1128) target = $region59
        $region58: #{tpu_custom_call.1} parent=47 // pred_region
          %s1132 = ssub.s32 512, 512
          %1133 = vsyncadd %s1124, %s1132
          %s1134 = smul.addr %s21, 4
          %s1135 = smul.addr %s1134, 128
          %s1136 = scalar_lea.hbm %s7, %s1135
          %s1137 = sshll.u32 %s1127, 4
          %s1138 = int_to_ptr.vmem [resolvable:$true] %s1137
          %1143 = dma.vmem_to_hbm [thread:$0]  %s1138, 512, %s1136, %s1124, 128, 128, 8
        $region59: #{tpu_custom_call.1} parent=47 // pred_fallthru
          _
      $region48: #{tpu_custom_call.1} parent=5 // pred_fallthru
        _
      %p1144 = scmp.le.s32.totalorder 2, %s16
      // Predicated region
      $region60: #{tpu_custom_call.1} parent=5 // pred_check
        %p1145 = pneg %p1144
      $region61: #{tpu_custom_call.1} parent=5 // pred_check_branch
        %1147 = sbr.rel (%p1145) target = $region63
      $region62: #{tpu_custom_call.1} parent=5 // pred_region
        %s1148 = ssub.s32 %s16, 2
        // Predicated region
        $region64: #{tpu_custom_call.1} parent=62 // pred_check
          %p1149 = pneg %p197
        $region65: #{tpu_custom_call.1} parent=62 // pred_check_branch
          %1151 = sbr.rel (%p1149) target = $region67
        $region66: #{tpu_custom_call.1} parent=62 // pred_region
          %s1152 = sand.u32 %s182, 1
          %s1153 = scalar_lea.sflag [#allocation5], %s1152
          %s1154 = sand.u32 %s182, 1
          %s1155 = smul.addr %s1154, 32
          %s1156 = scalar_lea.vmem [#allocation4], %s1155
          %1157 = dma.done %s1153, 512
        $region67: #{tpu_custom_call.1} parent=62 // pred_fallthru
          _
      $region63: #{tpu_custom_call.1} parent=5 // pred_fallthru
        _
    $region6: #{tpu_custom_call.1} parent=1 // loop_footer
      %s20 = sadd.s32 1, %s16
    $region7: #{tpu_custom_call.1} parent=1 // loop_footer_branch
      %15 = sbr.rel target = $region3
    $region8: #{tpu_custom_call.1} parent=1 // loop_exit
      _
    %1158 = vsyncpa [#allocation5], 1
    %s1159 = scalar_lea.sflag [#allocation5], 1
    %1160 = vsyncpa %s1159, 1

</llo_original>
